<compile_context>
chip_gen: v6e
topology: v6e:2x2x1
jax: 0.10.0
libtpu: 0.0.40
codegen_flags: <defaults>
</compile_context>

<pallas_src>
import math

import jax
import jax.numpy as jnp
from jax.experimental import pallas as pl
from jax.experimental.pallas import tpu as pltpu

LN_EPS = 1e-12  # config.layer_norm_eps default


def _round_up(x, m):
    return ((x + m - 1) // m) * m


def _default_tiles():
    """Pick (tm, tv) per TPU generation (decoder is W_dec-stream bound)."""
    try:
        kind = jax.devices()[0].device_kind.lower()
    except Exception:
        kind = ""
    if "v7" in kind:
        return 1024, 2048          # >=1024 rows of W_dec reuse per TC
    if "v6" in kind:
        return 1024, 2048          # ~650 rows needed to be MXU-bound
    if "v5 lite" in kind or "v5e" in kind or "v5lite" in kind:
        return 256, 1024           # near balance already; 16 MiB scoped VMEM
    return 512, 1024               # conservative fallback (v4 / v5p / unknown)


def _mlm_head_kernel(x_ref, w1_ref, b1_ref, g_ref, beta_ref,
                     w2_ref, b2_ref, out_ref, h_ref):
    """grid = (row_tiles, vocab_tiles); vocab is innermost.

    At vocab tile 0 the transform (dense + GELU + LayerNorm) runs once for the
    current row tile and is cached in VMEM scratch (bf16); every vocab tile
    then does the decoder matmul against the cached transformed hidden states,
    so the transform is amortized V/tv-fold and W_dec is streamed from HBM
    exactly M/tm times.
    """
    @pl.when(pl.program_id(1) == 0)
    def _():
        # dense: (tm, H)bf16 @ (H, H)bf16 -> f32 accumulation, + bias (f32)
        h = jnp.dot(x_ref[...], w1_ref[...],
                    preferred_element_type=jnp.float32) + b1_ref[...]
        # exact GELU (transformers ACT2FN["gelu"]): 0.5*x*(1+erf(x/sqrt(2)))
        h = 0.5 * h * (1.0 + jax.lax.erf(h * (1.0 / math.sqrt(2.0))))
        # LayerNorm over the hidden axis (biased variance, eps=1e-12), f32
        mean = jnp.mean(h, axis=-1, keepdims=True)
        var = jnp.mean((h - mean) ** 2, axis=-1, keepdims=True)
        h = (h - mean) * jax.lax.rsqrt(var + LN_EPS)
        h = h * g_ref[...] + beta_ref[...]
        h_ref[...] = h.astype(h_ref.dtype)

    # decoder: (tm, H)bf16 @ (H, tv)bf16 on the MXU, f32 accumulate, + bias
    acc = jnp.dot(h_ref[...], w2_ref[...], preferred_element_type=jnp.float32)
    out_ref[...] = (acc + b2_ref[...]).astype(out_ref.dtype)


def _vmem_estimate(tm, tv, H, out_bytes, io_bytes=2):
    """Rough per-core VMEM footprint of the pipelined buffers (bytes)."""
    hp = _round_up(H, 128)
    b = 0
    b += 2 * tm * H * io_bytes          # x tile (double buffered)
    b += 1 * H * H * io_bytes           # W1 (single buffered, constant)
    b += 3 * 1 * hp * 4                 # b1 / gamma / beta (tiny)
    b += 2 * H * tv * io_bytes          # W_dec tile (double buffered)
    b += 2 * 1 * tv * 4                 # decoder bias tile
    b += 2 * tm * tv * out_bytes        # output tile (double buffered)
    b += tm * H * io_bytes              # cached-h scratch
    return b


def _build_call(Mp, Vp, H, tm, tv, out_dtype, io_dtype,
                vmem_limit_bytes, single_buffer_consts):
    def const_spec(shape):
        if single_buffer_consts:
            # Constant across the whole grid -> one buffer is enough.
            return pl.BlockSpec(shape, lambda i, j: (0, 0),
                                pipeline_mode=pl.Buffered(1))
        return pl.BlockSpec(shape, lambda i, j: (0, 0))

    return pl.pallas_call(
        _mlm_head_kernel,
        out_shape=jax.ShapeDtypeStruct((Mp, Vp), out_dtype),
        grid_spec=pltpu.PrefetchScalarGridSpec(
            num_scalar_prefetch=0,
            grid=(Mp // tm, Vp // tv),
            in_specs=[
                pl.BlockSpec((tm, H), lambda i, j: (i, 0)),   # x rows (bf16)
                const_spec((H, H)),                           # dense weight (bf16)
                const_spec((1, H)),                           # dense bias (f32)
                const_spec((1, H)),                           # LN gamma (f32)
                const_spec((1, H)),                           # LN beta (f32)
                pl.BlockSpec((H, tv), lambda i, j: (0, j)),   # decoder weight (bf16)
                pl.BlockSpec((1, tv), lambda i, j: (0, j)),   # decoder bias (f32)
            ],
            out_specs=pl.BlockSpec((tm, tv), lambda i, j: (i, j)),
            scratch_shapes=[pltpu.VMEM((tm, H), io_dtype)],   # cached h
        ),
        compiler_params=pltpu.CompilerParams(
            dimension_semantics=("parallel", "arbitrary"),
            vmem_limit_bytes=vmem_limit_bytes,
        ),
    )


def unimo_mlm_head(x, w1, b1, ln_gamma, ln_beta, w_dec, b_dec, *,
                   tm=None, tv=None,
                   io_dtype=jnp.bfloat16,
                   out_dtype=None,
                   vmem_limit_bytes=None):
    """x: [B, S, H] -> logits [B, S, V].

    Weights: w1 [H, H] (dense.weight^T), b1 [H], ln_gamma/ln_beta [H],
    w_dec [H, V] (decoder.weight^T), b_dec [V].
    """
    B, S, H = x.shape
    V = w_dec.shape[1]
    M = B * S
    # bf16 logits by default (halves output HBM traffic / VMEM / vst pressure).
    out_dtype = jnp.bfloat16 if out_dtype is None else out_dtype

    dtm, dtv = _default_tiles()
    tm = dtm if tm is None else tm
    tv = dtv if tv is None else tv

    # Clamp tile sizes to the (padded) problem while keeping sublane/lane
    # alignment: tm a multiple of 8, tv a multiple of 128.
    tm = min(tm, _round_up(M, 8))
    tv = min(tv, _round_up(V, 128))

    Mp = _round_up(M, tm)
    Vp = _round_up(V, tv)

    # bf16 activations / weights for the MXU; f32 biases and LN params.
    x2 = x.reshape(M, H).astype(io_dtype)
    if Mp != M:
        x2 = jnp.pad(x2, ((0, Mp - M), (0, 0)))

    w2 = w_dec.astype(io_dtype)
    b2 = b_dec.astype(jnp.float32)
    if Vp != V:
        w2 = jnp.pad(w2, ((0, 0), (0, Vp - V)))
        b2 = jnp.pad(b2, (0, Vp - V))

    w1_b = w1.astype(io_dtype)
    b1_2 = b1.reshape(1, H).astype(jnp.float32)
    g_2 = ln_gamma.reshape(1, H).astype(jnp.float32)
    be_2 = ln_beta.reshape(1, H).astype(jnp.float32)
    b2_2 = b2.reshape(1, Vp)

    if vmem_limit_bytes is None:
        est = _vmem_estimate(tm, tv, H, jnp.dtype(out_dtype).itemsize)
        # generous headroom, capped at v7x's 64 MiB physical VMEM per TC
        vmem_limit_bytes = min(max(2 * est + (8 << 20), 32 << 20), 64 << 20)

    args = (x2, w1_b, b1_2, g_2, be_2, w2, b2_2)
    try:
        out = _build_call(Mp, Vp, H, tm, tv, out_dtype, io_dtype,
                          vmem_limit_bytes, single_buffer_consts=True)(*args)
    except Exception:
        # Fallback for toolchains that reject pipeline_mode=pl.Buffered(1);
        # identical semantics, just double-buffers the constant blocks.
        out = _build_call(Mp, Vp, H, tm, tv, out_dtype, io_dtype,
                          vmem_limit_bytes, single_buffer_consts=False)(*args)

    out = out[:M, :V]
    return out.reshape(B, S, V)


def _reference(x, w1, b1, ln_gamma, ln_beta, w_dec, b_dec):
    h = x @ w1 + b1
    h = 0.5 * h * (1.0 + jax.lax.erf(h / jnp.sqrt(2.0)))
    mean = jnp.mean(h, axis=-1, keepdims=True)
    var = jnp.mean((h - mean) ** 2, axis=-1, keepdims=True)
    h = (h - mean) * jax.lax.rsqrt(var + LN_EPS)
    h = h * ln_gamma + ln_beta
    return h @ w_dec + b_dec


if __name__ == "__main__":
    # small synthetic config that also exercises the padding path:
    # hidden_size=32, vocab_size=300 (not a multiple of 128), batch=2, seq=7
    B, S, H, V = 2, 7, 32, 300

    key = jax.random.PRNGKey(0)
    kx, kw1, kb1, kg, kbe, kwd = jax.random.split(key, 6)

    x = jax.random.normal(kx, (B, S, H), dtype=jnp.float32)

    # deterministic synthetic parameters (shapes per module __init__)
    w1 = 0.02 * jax.random.normal(kw1, (H, H), dtype=jnp.float32)     # dense.weight^T
    b1 = 0.01 * jax.random.normal(kb1, (H,), dtype=jnp.float32)       # dense.bias
    ln_gamma = 1.0 + 0.01 * jax.random.normal(kg, (H,), dtype=jnp.float32)
    ln_beta = 0.01 * jax.random.normal(kbe, (H,), dtype=jnp.float32)
    w_dec = 0.02 * jax.random.normal(kwd, (H, V), dtype=jnp.float32)  # decoder.weight^T
    b_dec = jnp.zeros((V,), dtype=jnp.float32)                        # self.bias = zeros

    out = unimo_mlm_head(x, w1, b1, ln_gamma, ln_beta, w_dec, b_dec)
    out = jax.block_until_ready(out)

    ref = _reference(x, w1, b1, ln_gamma, ln_beta, w_dec, b_dec)
    assert out.shape == (B, S, V)
    # bf16 activations / weights / logits (f32 accumulation) -> loose tolerance
    assert jnp.allclose(out.astype(jnp.float32), ref, atol=3e-2, rtol=3e-2), \
        "mismatch vs reference"

    print("KERNEL_OK")
</pallas_src>

<mosaic_0001>
module attributes {stable_mosaic.version = 11 : i64} {
  func.func @_mlm_head_kernel(%arg0: i32, %arg1: i32, %arg2: memref<16x32xbf16, #tpu.memory_space<vmem>>, %arg3: memref<32x32xbf16, #tpu.memory_space<vmem>>, %arg4: memref<1x32xf32, #tpu.memory_space<vmem>>, %arg5: memref<1x32xf32, #tpu.memory_space<vmem>>, %arg6: memref<1x32xf32, #tpu.memory_space<vmem>>, %arg7: memref<32x384xbf16, #tpu.memory_space<vmem>>, %arg8: memref<1x384xf32, #tpu.memory_space<vmem>>, %arg9: memref<16x384xbf16, #tpu.memory_space<vmem>>, %arg10: memref<16x32xbf16, #tpu.memory_space<vmem>>) attributes {dimension_semantics = [#tpu.dimension_semantics<parallel>, #tpu.dimension_semantics<arbitrary>], iteration_bounds = array<i64: 1, 1>, scalar_prefetch = 0 : i64, scratch_operands = 1 : i64, tpu.core_type = #tpu.core_type<tc>, window_params = [{transform_indices = @transform_0, window_bounds = array<i64: 16, 32>}, {pipeline_mode = #tpu.pipeline_mode<synchronous>, transform_indices = @transform_1, window_bounds = array<i64: 32, 32>}, {pipeline_mode = #tpu.pipeline_mode<synchronous>, transform_indices = @transform_2, window_bounds = array<i64: 1, 32>}, {pipeline_mode = #tpu.pipeline_mode<synchronous>, transform_indices = @transform_3, window_bounds = array<i64: 1, 32>}, {pipeline_mode = #tpu.pipeline_mode<synchronous>, transform_indices = @transform_4, window_bounds = array<i64: 1, 32>}, {transform_indices = @transform_5, window_bounds = array<i64: 32, 384>}, {transform_indices = @transform_6, window_bounds = array<i64: 1, 384>}, {transform_indices = @transform_7, window_bounds = array<i64: 16, 384>}]} {
    %c0_i32 = arith.constant 0 : i32
    %0 = arith.cmpi eq, %arg1, %c0_i32 : i32
    %1 = arith.extui %0 : i1 to i32
    %c0_i32_0 = arith.constant 0 : i32
    %2 = arith.cmpi ne, %1, %c0_i32_0 : i32
    scf.if %2 {
      %c0_8 = arith.constant 0 : index
      %c0_9 = arith.constant 0 : index
      %11 = vector.load %arg2[%c0_8, %c0_9] : memref<16x32xbf16, #tpu.memory_space<vmem>>, vector<16x32xbf16>
      %c0_10 = arith.constant 0 : index
      %c0_11 = arith.constant 0 : index
      %12 = vector.load %arg3[%c0_10, %c0_11] : memref<32x32xbf16, #tpu.memory_space<vmem>>, vector<32x32xbf16>
      %cst_12 = arith.constant dense<0.000000e+00> : vector<16x32xf32>
      %13 = tpu.matmul %11, %12, %cst_12 {dimension_numbers = #tpu.dot_dimension_numbers<[1], [0], [0], [1], [0, 0, 1, 1], [], []>} : vector<16x32xbf16>, vector<32x32xbf16>, vector<16x32xf32> -> vector<16x32xf32>
      %c0_13 = arith.constant 0 : index
      %c0_14 = arith.constant 0 : index
      %14 = vector.load %arg4[%c0_13, %c0_14] : memref<1x32xf32, #tpu.memory_space<vmem>>, vector<1x32xf32>
      %15 = vector.broadcast %14 : vector<1x32xf32> to vector<16x32xf32>
      %16 = arith.addf %13, %15 : vector<16x32xf32>
      %cst_15 = arith.constant 5.000000e-01 : f32
      %17 = vector.broadcast %cst_15 : f32 to vector<16x32xf32>
      %18 = arith.mulf %17, %16 : vector<16x32xf32>
      %cst_16 = arith.constant 0.707106769 : f32
      %19 = vector.broadcast %cst_16 : f32 to vector<16x32xf32>
      %20 = arith.mulf %16, %19 : vector<16x32xf32>
      %21 = math.erf %20 : vector<16x32xf32>
      %cst_17 = arith.constant 1.000000e+00 : f32
      %22 = vector.broadcast %cst_17 : f32 to vector<16x32xf32>
      %23 = arith.addf %22, %21 : vector<16x32xf32>
      %24 = arith.mulf %18, %23 : vector<16x32xf32>
      %cst_18 = arith.constant dense<0.000000e+00> : vector<16xf32>
      %25 = vector.multi_reduction <add>, %24, %cst_18 [1] : vector<16x32xf32> to vector<16xf32>
      %26 = vector.shape_cast %25 : vector<16xf32> to vector<16x1xf32>
      %cst_19 = arith.constant 3.200000e+01 : f32
      %27 = vector.broadcast %cst_19 : f32 to vector<16x1xf32>
      %28 = arith.divf %26, %27 : vector<16x1xf32>
      %29 = vector.broadcast %28 : vector<16x1xf32> to vector<16x32xf32>
      %30 = arith.subf %24, %29 : vector<16x32xf32>
      %31 = arith.mulf %30, %30 : vector<16x32xf32>
      %cst_20 = arith.constant dense<0.000000e+00> : vector<16xf32>
      %32 = vector.multi_reduction <add>, %31, %cst_20 [1] : vector<16x32xf32> to vector<16xf32>
      %33 = vector.shape_cast %32 : vector<16xf32> to vector<16x1xf32>
      %cst_21 = arith.constant 3.200000e+01 : f32
      %34 = vector.broadcast %cst_21 : f32 to vector<16x1xf32>
      %35 = arith.divf %33, %34 : vector<16x1xf32>
      %36 = vector.broadcast %28 : vector<16x1xf32> to vector<16x32xf32>
      %37 = arith.subf %24, %36 : vector<16x32xf32>
      %cst_22 = arith.constant 9.99999996E-13 : f32
      %38 = vector.broadcast %cst_22 : f32 to vector<16x1xf32>
      %39 = arith.addf %35, %38 : vector<16x1xf32>
      %40 = math.rsqrt %39 : vector<16x1xf32>
      %41 = vector.broadcast %40 : vector<16x1xf32> to vector<16x32xf32>
      %42 = arith.mulf %37, %41 : vector<16x32xf32>
      %c0_23 = arith.constant 0 : index
      %c0_24 = arith.constant 0 : index
      %43 = vector.load %arg5[%c0_23, %c0_24] : memref<1x32xf32, #tpu.memory_space<vmem>>, vector<1x32xf32>
      %44 = vector.broadcast %43 : vector<1x32xf32> to vector<16x32xf32>
      %45 = arith.mulf %42, %44 : vector<16x32xf32>
      %c0_25 = arith.constant 0 : index
      %c0_26 = arith.constant 0 : index
      %46 = vector.load %arg6[%c0_25, %c0_26] : memref<1x32xf32, #tpu.memory_space<vmem>>, vector<1x32xf32>
      %47 = vector.broadcast %46 : vector<1x32xf32> to vector<16x32xf32>
      %48 = arith.addf %45, %47 : vector<16x32xf32>
      %49 = arith.truncf %48 : vector<16x32xf32> to vector<16x32xbf16>
      %c0_27 = arith.constant 0 : index
      %c0_28 = arith.constant 0 : index
      %50 = vector.load %arg10[%c0_27, %c0_28] : memref<16x32xbf16, #tpu.memory_space<vmem>>, vector<16x32xbf16>
      tpu.vector_store %arg10[%c0_27, %c0_28], %49 {strides = array<i32>} : memref<16x32xbf16, #tpu.memory_space<vmem>>, vector<16x32xbf16>,
    } else {
    }
    %c0 = arith.constant 0 : index
    %c0_1 = arith.constant 0 : index
    %3 = vector.load %arg10[%c0, %c0_1] : memref<16x32xbf16, #tpu.memory_space<vmem>>, vector<16x32xbf16>
    %c0_2 = arith.constant 0 : index
    %c0_3 = arith.constant 0 : index
    %4 = vector.load %arg7[%c0_2, %c0_3] : memref<32x384xbf16, #tpu.memory_space<vmem>>, vector<32x384xbf16>
    %cst = arith.constant dense<0.000000e+00> : vector<16x384xf32>
    %5 = tpu.matmul %3, %4, %cst {dimension_numbers = #tpu.dot_dimension_numbers<[1], [0], [0], [1], [0, 0, 1, 1], [], []>} : vector<16x32xbf16>, vector<32x384xbf16>, vector<16x384xf32> -> vector<16x384xf32>
    %c0_4 = arith.constant 0 : index
    %c0_5 = arith.constant 0 : index
    %6 = vector.load %arg8[%c0_4, %c0_5] : memref<1x384xf32, #tpu.memory_space<vmem>>, vector<1x384xf32>
    %7 = vector.broadcast %6 : vector<1x384xf32> to vector<16x384xf32>
    %8 = arith.addf %5, %7 : vector<16x384xf32>
    %9 = arith.truncf %8 : vector<16x384xf32> to vector<16x384xbf16>
    %c0_6 = arith.constant 0 : index
    %c0_7 = arith.constant 0 : index
    %10 = vector.load %arg9[%c0_6, %c0_7] : memref<16x384xbf16, #tpu.memory_space<vmem>>, vector<16x384xbf16>
    tpu.vector_store %arg9[%c0_6, %c0_7], %9 {strides = array<i32>} : memref<16x384xbf16, #tpu.memory_space<vmem>>, vector<16x384xbf16>,
    return
  }
  func.func @transform_0(%arg0: i32, %arg1: i32) -> (i32, i32) {
    %c0_i32 = arith.constant 0 : i32
    %c0_i32_0 = arith.constant 0 : i32
    return %arg0, %c0_i32 : i32, i32
  }
  func.func @transform_1(%arg0: i32, %arg1: i32) -> (i32, i32) {
    %c0_i32 = arith.constant 0 : i32
    %c0_i32_0 = arith.constant 0 : i32
    %c0_i32_1 = arith.constant 0 : i32
    return %c0_i32, %c0_i32_0 : i32, i32
  }
  func.func @transform_2(%arg0: i32, %arg1: i32) -> (i32, i32) {
    %c0_i32 = arith.constant 0 : i32
    %c0_i32_0 = arith.constant 0 : i32
    %c0_i32_1 = arith.constant 0 : i32
    return %c0_i32, %c0_i32_0 : i32, i32
  }
  func.func @transform_3(%arg0: i32, %arg1: i32) -> (i32, i32) {
    %c0_i32 = arith.constant 0 : i32
    %c0_i32_0 = arith.constant 0 : i32
    %c0_i32_1 = arith.constant 0 : i32
    return %c0_i32, %c0_i32_0 : i32, i32
  }
  func.func @transform_4(%arg0: i32, %arg1: i32) -> (i32, i32) {
    %c0_i32 = arith.constant 0 : i32
    %c0_i32_0 = arith.constant 0 : i32
    %c0_i32_1 = arith.constant 0 : i32
    return %c0_i32, %c0_i32_0 : i32, i32
  }
  func.func @transform_5(%arg0: i32, %arg1: i32) -> (i32, i32) {
    %c0_i32 = arith.constant 0 : i32
    %c0_i32_0 = arith.constant 0 : i32
    return %c0_i32, %arg1 : i32, i32
  }
  func.func @transform_6(%arg0: i32, %arg1: i32) -> (i32, i32) {
    %c0_i32 = arith.constant 0 : i32
    %c0_i32_0 = arith.constant 0 : i32
    return %c0_i32, %arg1 : i32, i32
  }
  func.func @transform_7(%arg0: i32, %arg1: i32) -> (i32, i32) {
    %c0_i32 = arith.constant 0 : i32
    return %arg0, %arg1 : i32, i32
  }
}

module attributes {stable_mosaic.version = 11 : i64} {
  func.func @_mlm_head_kernel(%arg0: i32, %arg1: i32, %arg2: memref<16x32xbf16, #tpu.memory_space<vmem>>, %arg3: memref<32x32xbf16, #tpu.memory_space<vmem>>, %arg4: memref<1x32xf32, #tpu.memory_space<vmem>>, %arg5: memref<1x32xf32, #tpu.memory_space<vmem>>, %arg6: memref<1x32xf32, #tpu.memory_space<vmem>>, %arg7: memref<32x384xbf16, #tpu.memory_space<vmem>>, %arg8: memref<1x384xf32, #tpu.memory_space<vmem>>, %arg9: memref<16x384xbf16, #tpu.memory_space<vmem>>, %arg10: memref<16x32xbf16, #tpu.memory_space<vmem>>) attributes {dimension_semantics = [#tpu.dimension_semantics<parallel>, #tpu.dimension_semantics<arbitrary>], iteration_bounds = array<i64: 1, 1>, scalar_prefetch = 0 : i64, scratch_operands = 1 : i64, tpu.core_type = #tpu.core_type<tc>, window_params = [{transform_indices = @transform_0, window_bounds = array<i64: 16, 32>}, {pipeline_mode = #tpu.pipeline_mode<synchronous>, transform_indices = @transform_1, window_bounds = array<i64: 32, 32>}, {pipeline_mode = #tpu.pipeline_mode<synchronous>, transform_indices = @transform_2, window_bounds = array<i64: 1, 32>}, {pipeline_mode = #tpu.pipeline_mode<synchronous>, transform_indices = @transform_3, window_bounds = array<i64: 1, 32>}, {pipeline_mode = #tpu.pipeline_mode<synchronous>, transform_indices = @transform_4, window_bounds = array<i64: 1, 32>}, {transform_indices = @transform_5, window_bounds = array<i64: 32, 384>}, {transform_indices = @transform_6, window_bounds = array<i64: 1, 384>}, {transform_indices = @transform_7, window_bounds = array<i64: 16, 384>}]} {
    %c0_i32 = arith.constant 0 : i32
    %0 = arith.cmpi eq, %arg1, %c0_i32 : i32
    %1 = arith.extui %0 : i1 to i32
    %c0_i32_0 = arith.constant 0 : i32
    %2 = arith.cmpi ne, %1, %c0_i32_0 : i32
    scf.if %2 {
      %c0_8 = arith.constant 0 : index
      %c0_9 = arith.constant 0 : index
      %11 = vector.load %arg2[%c0_8, %c0_9] : memref<16x32xbf16, #tpu.memory_space<vmem>>, vector<16x32xbf16>
      %c0_10 = arith.constant 0 : index
      %c0_11 = arith.constant 0 : index
      %12 = vector.load %arg3[%c0_10, %c0_11] : memref<32x32xbf16, #tpu.memory_space<vmem>>, vector<32x32xbf16>
      %cst_12 = arith.constant dense<0.000000e+00> : vector<16x32xf32>
      %13 = tpu.matmul %11, %12, %cst_12 {dimension_numbers = #tpu.dot_dimension_numbers<[1], [0], [0], [1], [0, 0, 1, 1], [], []>} : vector<16x32xbf16>, vector<32x32xbf16>, vector<16x32xf32> -> vector<16x32xf32>
      %c0_13 = arith.constant 0 : index
      %c0_14 = arith.constant 0 : index
      %14 = vector.load %arg4[%c0_13, %c0_14] : memref<1x32xf32, #tpu.memory_space<vmem>>, vector<1x32xf32>
      %15 = vector.broadcast %14 : vector<1x32xf32> to vector<16x32xf32>
      %16 = arith.addf %13, %15 : vector<16x32xf32>
      %cst_15 = arith.constant 5.000000e-01 : f32
      %17 = vector.broadcast %cst_15 : f32 to vector<16x32xf32>
      %18 = arith.mulf %17, %16 : vector<16x32xf32>
      %cst_16 = arith.constant 0.707106769 : f32
      %19 = vector.broadcast %cst_16 : f32 to vector<16x32xf32>
      %20 = arith.mulf %16, %19 : vector<16x32xf32>
      %21 = math.erf %20 : vector<16x32xf32>
      %cst_17 = arith.constant 1.000000e+00 : f32
      %22 = vector.broadcast %cst_17 : f32 to vector<16x32xf32>
      %23 = arith.addf %22, %21 : vector<16x32xf32>
      %24 = arith.mulf %18, %23 : vector<16x32xf32>
      %cst_18 = arith.constant dense<0.000000e+00> : vector<16xf32>
      %25 = vector.multi_reduction <add>, %24, %cst_18 [1] : vector<16x32xf32> to vector<16xf32>
      %26 = vector.shape_cast %25 : vector<16xf32> to vector<16x1xf32>
      %cst_19 = arith.constant 3.200000e+01 : f32
      %27 = vector.broadcast %cst_19 : f32 to vector<16x1xf32>
      %28 = arith.divf %26, %27 : vector<16x1xf32>
      %29 = vector.broadcast %28 : vector<16x1xf32> to vector<16x32xf32>
      %30 = arith.subf %24, %29 : vector<16x32xf32>
      %31 = arith.mulf %30, %30 : vector<16x32xf32>
      %cst_20 = arith.constant dense<0.000000e+00> : vector<16xf32>
      %32 = vector.multi_reduction <add>, %31, %cst_20 [1] : vector<16x32xf32> to vector<16xf32>
      %33 = vector.shape_cast %32 : vector<16xf32> to vector<16x1xf32>
      %cst_21 = arith.constant 3.200000e+01 : f32
      %34 = vector.broadcast %cst_21 : f32 to vector<16x1xf32>
      %35 = arith.divf %33, %34 : vector<16x1xf32>
      %36 = vector.broadcast %28 : vector<16x1xf32> to vector<16x32xf32>
      %37 = arith.subf %24, %36 : vector<16x32xf32>
      %cst_22 = arith.constant 9.99999996E-13 : f32
      %38 = vector.broadcast %cst_22 : f32 to vector<16x1xf32>
      %39 = arith.addf %35, %38 : vector<16x1xf32>
      %40 = math.rsqrt %39 : vector<16x1xf32>
      %41 = vector.broadcast %40 : vector<16x1xf32> to vector<16x32xf32>
      %42 = arith.mulf %37, %41 : vector<16x32xf32>
      %c0_23 = arith.constant 0 : index
      %c0_24 = arith.constant 0 : index
      %43 = vector.load %arg5[%c0_23, %c0_24] : memref<1x32xf32, #tpu.memory_space<vmem>>, vector<1x32xf32>
      %44 = vector.broadcast %43 : vector<1x32xf32> to vector<16x32xf32>
      %45 = arith.mulf %42, %44 : vector<16x32xf32>
      %c0_25 = arith.constant 0 : index
      %c0_26 = arith.constant 0 : index
      %46 = vector.load %arg6[%c0_25, %c0_26] : memref<1x32xf32, #tpu.memory_space<vmem>>, vector<1x32xf32>
      %47 = vector.broadcast %46 : vector<1x32xf32> to vector<16x32xf32>
      %48 = arith.addf %45, %47 : vector<16x32xf32>
      %49 = arith.truncf %48 : vector<16x32xf32> to vector<16x32xbf16>
      %c0_27 = arith.constant 0 : index
      %c0_28 = arith.constant 0 : index
      %50 = vector.load %arg10[%c0_27, %c0_28] : memref<16x32xbf16, #tpu.memory_space<vmem>>, vector<16x32xbf16>
      tpu.vector_store %arg10[%c0_27, %c0_28], %49 {strides = array<i32>} : memref<16x32xbf16, #tpu.memory_space<vmem>>, vector<16x32xbf16>,
    } else {
    }
    %c0 = arith.constant 0 : index
    %c0_1 = arith.constant 0 : index
    %3 = vector.load %arg10[%c0, %c0_1] : memref<16x32xbf16, #tpu.memory_space<vmem>>, vector<16x32xbf16>
    %c0_2 = arith.constant 0 : index
    %c0_3 = arith.constant 0 : index
    %4 = vector.load %arg7[%c0_2, %c0_3] : memref<32x384xbf16, #tpu.memory_space<vmem>>, vector<32x384xbf16>
    %cst = arith.constant dense<0.000000e+00> : vector<16x384xf32>
    %5 = tpu.matmul %3, %4, %cst {dimension_numbers = #tpu.dot_dimension_numbers<[1], [0], [0], [1], [0, 0, 1, 1], [], []>} : vector<16x32xbf16>, vector<32x384xbf16>, vector<16x384xf32> -> vector<16x384xf32>
    %c0_4 = arith.constant 0 : index
    %c0_5 = arith.constant 0 : index
    %6 = vector.load %arg8[%c0_4, %c0_5] : memref<1x384xf32, #tpu.memory_space<vmem>>, vector<1x384xf32>
    %7 = vector.broadcast %6 : vector<1x384xf32> to vector<16x384xf32>
    %8 = arith.addf %5, %7 : vector<16x384xf32>
    %9 = arith.truncf %8 : vector<16x384xf32> to vector<16x384xbf16>
    %c0_6 = arith.constant 0 : index
    %c0_7 = arith.constant 0 : index
    %10 = vector.load %arg9[%c0_6, %c0_7] : memref<16x384xbf16, #tpu.memory_space<vmem>>, vector<16x384xbf16>
    tpu.vector_store %arg9[%c0_6, %c0_7], %9 {strides = array<i32>} : memref<16x384xbf16, #tpu.memory_space<vmem>>, vector<16x384xbf16>,
    return
  }
  func.func @transform_0(%arg0: i32, %arg1: i32) -> (i32, i32) {
    %c0_i32 = arith.constant 0 : i32
    %c0_i32_0 = arith.constant 0 : i32
    return %arg0, %c0_i32 : i32, i32
  }
  func.func @transform_1(%arg0: i32, %arg1: i32) -> (i32, i32) {
    %c0_i32 = arith.constant 0 : i32
    %c0_i32_0 = arith.constant 0 : i32
    %c0_i32_1 = arith.constant 0 : i32
    return %c0_i32, %c0_i32_0 : i32, i32
  }
  func.func @transform_2(%arg0: i32, %arg1: i32) -> (i32, i32) {
    %c0_i32 = arith.constant 0 : i32
    %c0_i32_0 = arith.constant 0 : i32
    %c0_i32_1 = arith.constant 0 : i32
    return %c0_i32, %c0_i32_0 : i32, i32
  }
  func.func @transform_3(%arg0: i32, %arg1: i32) -> (i32, i32) {
    %c0_i32 = arith.constant 0 : i32
    %c0_i32_0 = arith.constant 0 : i32
    %c0_i32_1 = arith.constant 0 : i32
    return %c0_i32, %c0_i32_0 : i32, i32
  }
  func.func @transform_4(%arg0: i32, %arg1: i32) -> (i32, i32) {
    %c0_i32 = arith.constant 0 : i32
    %c0_i32_0 = arith.constant 0 : i32
    %c0_i32_1 = arith.constant 0 : i32
    return %c0_i32, %c0_i32_0 : i32, i32
  }
  func.func @transform_5(%arg0: i32, %arg1: i32) -> (i32, i32) {
    %c0_i32 = arith.constant 0 : i32
    %c0_i32_0 = arith.constant 0 : i32
    return %c0_i32, %arg1 : i32, i32
  }
  func.func @transform_6(%arg0: i32, %arg1: i32) -> (i32, i32) {
    %c0_i32 = arith.constant 0 : i32
    %c0_i32_0 = arith.constant 0 : i32
    return %c0_i32, %arg1 : i32, i32
  }
  func.func @transform_7(%arg0: i32, %arg1: i32) -> (i32, i32) {
    %c0_i32 = arith.constant 0 : i32
    return %arg0, %arg1 : i32, i32
  }
}

</mosaic_0001>

<llo_original>
// kernel: tpu_custom_call.1
$region0: #{tpu_custom_call.1}
  #allocation0 [shape = 'u32[]', space=smem, size = 0x4, offset = 0x4, fixed_abs, tag = 'smem constant byte address 0x4 - core index']
  #allocation1 [shape = 'u32[144,128]{1,0:T(1,128)}', space=vmem, size = 0x12000, scoped, tag = 'internal scratch']
  #allocation2 [shape = 'bf16[16,32]{1,0:T(8,128)(2,1)}', space=vmem, size = 0x1000, scoped, tag = 'scratch operand']
  %s0 = inlined_call_operand.hbm [shape: bf16[16,32], index: 0, kind: input, shape index: {}]
  %s1 = inlined_call_operand.hbm [shape: bf16[32,32], index: 1, kind: input, shape index: {}]
  %s2 = inlined_call_operand.vmem [shape: f32[1,32], index: 2, kind: input, shape index: {}]
  %s3 = inlined_call_operand.vmem [shape: f32[1,32], index: 3, kind: input, shape index: {}]
  %s4 = inlined_call_operand.vmem [shape: f32[1,32], index: 4, kind: input, shape index: {}]
  %s5 = inlined_call_operand.hbm [shape: bf16[32,384], index: 5, kind: input, shape index: {}]
  %s6 = inlined_call_operand.vmem [shape: f32[1,384], index: 6, kind: input, shape index: {}]
  %s7 = inlined_call_operand.hbm [shape: bf16[16,384], index: 7, kind: output, shape index: {}]
  %s8 = sld [smem:[#allocation0]]
  $region54: #{tpu_custom_call.1} parent=0
    _
  %s10 = ssub.s32 1, %s8
  %s11 = scalar_select 0, %s10, %s8
  $region1: #{tpu_custom_call.1} parent=0
    #allocation3 [shape = 'u8[4096]{0}', space=vmem, size = 0x1000, scoped, tag = 'input window, operand 0, single buffered']
    #allocation4 [shape = 's32[1]{0}', space=sflag, size = 0x4, scoped, tag = 'scoped memory for tpu_custom_call.1']
    #allocation5 [shape = 's32[1]{0}', space=sflag, size = 0x4, scoped, tag = 'scoped memory for tpu_custom_call.1']
    #allocation6 [shape = 'u8[8192]{0}', space=vmem, size = 0x2000, scoped, tag = 'input window, operand 1, single buffered']
    #allocation7 [shape = 's32[1]{0}', space=sflag, size = 0x4, scoped, tag = 'scoped memory for tpu_custom_call.1']
    #allocation8 [shape = 'u8[24576]{0}', space=vmem, size = 0x6000, scoped, tag = 'input window, operand 5, single buffered']
    #allocation9 [shape = 'u8[12288]{0}', space=vmem, size = 0x3000, scoped, tag = 'output window, operand 0, single buffered']
    %12 = vsyncpa [#allocation4], 0
    %13 = vsyncpa [#allocation7], 0
    %14 = vsyncpa [#allocation5], 0
    // Predicated region
    $region2: #{tpu_custom_call.1} parent=1 // pred_check
      _
    $region3: #{tpu_custom_call.1} parent=1 // pred_check_branch
      %16 = sbr.rel (0) target = $region5
    $region4: #{tpu_custom_call.1} parent=1 // pred_region
      %s18 = ssub.s32 128, 128
      %19 = vsyncadd [#allocation4], %s18
      %s20 = sshll.u32 [#allocation3], 4
      %s21 = int_to_ptr.vmem [resolvable:$true] %s20
      %26 = dma.hbm_to_vmem [thread:$0]  %s0, 128, %s21, [#allocation4], 64, 64, 4
    $region5: #{tpu_custom_call.1} parent=1 // pred_fallthru
      _
    // Predicated region
    $region6: #{tpu_custom_call.1} parent=1 // pred_check
      _
    $region7: #{tpu_custom_call.1} parent=1 // pred_check_branch
      %28 = sbr.rel (0) target = $region9
    $region8: #{tpu_custom_call.1} parent=1 // pred_region
      %s30 = ssub.s32 256, 256
      %31 = vsyncadd [#allocation7], %s30
      %s32 = sshll.u32 [#allocation6], 4
      %s33 = int_to_ptr.vmem [resolvable:$true] %s32
      %38 = dma.hbm_to_vmem [thread:$0]  %s1, 256, %s33, [#allocation7], 64, 64, 4
    $region9: #{tpu_custom_call.1} parent=1 // pred_fallthru
      _
    // Predicated region
    $region10: #{tpu_custom_call.1} parent=1 // pred_check
      _
    $region11: #{tpu_custom_call.1} parent=1 // pred_check_branch
      %40 = sbr.rel (0) target = $region13
    $region12: #{tpu_custom_call.1} parent=1 // pred_region
      _
    $region13: #{tpu_custom_call.1} parent=1 // pred_fallthru
      _
    // Predicated region
    $region14: #{tpu_custom_call.1} parent=1 // pred_check
      _
    $region15: #{tpu_custom_call.1} parent=1 // pred_check_branch
      %42 = sbr.rel (0) target = $region17
    $region16: #{tpu_custom_call.1} parent=1 // pred_region
      _
    $region17: #{tpu_custom_call.1} parent=1 // pred_fallthru
      _
    // Predicated region
    $region18: #{tpu_custom_call.1} parent=1 // pred_check
      _
    $region19: #{tpu_custom_call.1} parent=1 // pred_check_branch
      %44 = sbr.rel (0) target = $region21
    $region20: #{tpu_custom_call.1} parent=1 // pred_region
      _
    $region21: #{tpu_custom_call.1} parent=1 // pred_fallthru
      _
    // Predicated region
    $region22: #{tpu_custom_call.1} parent=1 // pred_check
      _
    $region23: #{tpu_custom_call.1} parent=1 // pred_check_branch
      %46 = sbr.rel (0) target = $region25
    $region24: #{tpu_custom_call.1} parent=1 // pred_region
      %s48 = ssub.s32 768, 768
      %49 = vsyncadd [#allocation7], %s48
      %s50 = sshll.u32 [#allocation8], 4
      %s51 = int_to_ptr.vmem [resolvable:$true] %s50
      %56 = dma.hbm_to_vmem [thread:$0]  %s5, 768, %s51, [#allocation7], 192, 192, 12
    $region25: #{tpu_custom_call.1} parent=1 // pred_fallthru
      _
    // Predicated region
    $region26: #{tpu_custom_call.1} parent=1 // pred_check
      _
    $region27: #{tpu_custom_call.1} parent=1 // pred_check_branch
      %58 = sbr.rel (0) target = $region29
    $region28: #{tpu_custom_call.1} parent=1 // pred_region
      _
    $region29: #{tpu_custom_call.1} parent=1 // pred_fallthru
      _
    // Predicated region
    $region30: #{tpu_custom_call.1} parent=1 // pred_check
      _
    $region31: #{tpu_custom_call.1} parent=1 // pred_check_branch
      %60 = sbr.rel (0) target = $region33
    $region32: #{tpu_custom_call.1} parent=1 // pred_region
      %61 = dma.done [#allocation4], 128
    $region33: #{tpu_custom_call.1} parent=1 // pred_fallthru
      _
    // Predicated region
    $region34: #{tpu_custom_call.1} parent=1 // pred_check
      _
    $region35: #{tpu_custom_call.1} parent=1 // pred_check_branch
      %63 = sbr.rel (0) target = $region37
    $region36: #{tpu_custom_call.1} parent=1 // pred_region
      %64 = dma.done [#allocation7], 256
    $region37: #{tpu_custom_call.1} parent=1 // pred_fallthru
      _
    // Predicated region
    $region38: #{tpu_custom_call.1} parent=1 // pred_check
      _
    $region39: #{tpu_custom_call.1} parent=1 // pred_check_branch
      %66 = sbr.rel (0) target = $region41
    $region40: #{tpu_custom_call.1} parent=1 // pred_region
      %67 = dma.done [#allocation7], 768
    $region41: #{tpu_custom_call.1} parent=1 // pred_fallthru
      _
    %p69 = scmp.eq.s32.totalorder 0, 0
    // Predicated region
    $region42: #{tpu_custom_call.1} parent=1 // pred_check
      %p70 = pneg %p69
    $region43: #{tpu_custom_call.1} parent=1 // pred_check_branch
      %72 = sbr.rel (%p70) target = $region45
    $region44: #{tpu_custom_call.1} parent=1 // pred_region
      %v73 = vld [vmem:[#allocation3] sm:$0xf]
      %v74 = vld [vmem:[#allocation3 + $0x4] sm:$0xf]
      %v75 = vld [vmem:[#allocation6] sm:$0xf]
      %v76 = vld [vmem:[#allocation6 + $0x4] sm:$0xf]
      %v77 = vld [vmem:[#allocation6 + $0x8] sm:$0xf]
      %v78 = vld [vmem:[#allocation6 + $0xc] sm:$0xf]
      %v79 = vld [vmem:[%s2] sm:$0x1]
      %v81 = vlaneseq
      %v82 = vshrl.u32 %v81, 7
      %v83 = vsub.s32 0, %v82
      %v84 = vrot.slane %v79, %v83
      %v88 = vunpack.c.l.b16 %v73
      %v89 = vunpack.c.l.b16 %v74
      %v90 = vpack.c.b16 %v89, %v88
      %v95 = vunpack.c.l.b16 %v75
      %v96 = vunpack.c.l.b16 %v76
      %v97 = vunpack.c.l.b16 %v77
      %v98 = vunpack.c.l.b16 %v78
      %v99 = vpack.c.b16 %v96, %v95
      %v100 = vpack.c.b16 %v98, %v97
      %vm103 = vcmask 261120
      %v105 = vsel %vm103, %v90, 0
      %107 = vmatprep.subr.bf16.mxu0 0
      %108 = vmatpush1.bf16.msra.mxu0 0
      %109 = vmatprep.subr.bf16.mxu0 0
      %110 = vmatpush1.bf16.msra.mxu0 0
      %111 = vmatprep.subr.bf16.mxu0 0
      %112 = vmatpush1.bf16.msra.mxu0 0
      %113 = vmatprep.subr.bf16.mxu0 0
      %114 = vmatpush1.bf16.msra.mxu0 0
      %115 = vmatprep.subr.bf16.mxu0 0
      %116 = vmatpush1.bf16.msra.mxu0 0
      %117 = vmatprep.subr.bf16.mxu0 0
      %118 = vmatpush1.bf16.msra.mxu0 0
      %119 = vmatprep.subr.bf16.mxu0 0
      %120 = vmatpush1.bf16.msra.mxu0 %v100
      %121 = vmatprep.subr.bf16.mxu0 0
      %122 = vmatpush1.bf16.msra.mxu0 %v99
      %123 = vmatprep.subr.bf16.mxu0 0
      %124 = vmatpush2.bf16.msra.mxu0 0
      %125 = vmatprep.subr.bf16.mxu0 0
      %126 = vmatpush2.bf16.msra.mxu0 0
      %127 = vmatprep.subr.bf16.mxu0 0
      %128 = vmatpush2.bf16.msra.mxu0 0
      %129 = vmatprep.subr.bf16.mxu0 0
      %130 = vmatpush2.bf16.msra.mxu0 0
      %131 = vmatprep.subr.bf16.mxu0 0
      %132 = vmatpush2.bf16.msra.mxu0 0
      %133 = vmatprep.subr.bf16.mxu0 0
      %134 = vmatpush2.bf16.msra.mxu0 0
      %135 = vmatprep.subr.bf16.mxu0 0
      %136 = vmatpush2.bf16.msra.mxu0 0
      %137 = vmatprep.subr.bf16.mxu0 0
      %138 = vmatpush2.bf16.msra.mxu0 0
      %139 = vmatprep.mubr.bf16.mxu0 0
      %140 = vmatmul.mubr.bf16.gmra.mxu0 %v105
      %v141 = vpop.f32.mrf.mxu0
      %v142 = vadd.f32 %v84, %v141
      %v143 = vpop.f32.mrf.mxu0
      %v144 = vpop.f32.mrf.mxu0
      %v145 = vadd.f32 %v84, %v144
      %v146 = vpop.f32.mrf.mxu0
      %147 = vdwg.mxu0
      %v148 = vmul.f32 %v142, 0.5
      %v149 = vmul.f32 %v145, 0.5
      %v150 = vmul.f32 %v142, 0.70710677
      %v151 = vmul.f32 %v145, 0.70710677
      %v152 = verf.f32.pop %v150
      %v153 = verf.f32.pop %v151
      %v154 = vadd.f32 %v152, 1.0
      %v155 = vadd.f32 %v153, 1.0
      %v156 = vmul.f32 %v148, %v154
      %v157 = vmul.f32 %v149, %v155
      %v158 = vsel %vm103, %v156, 0.0
      %159 = vadd.xlane.f32.xlu0 %v158
      %v160 = vpop.xlane.xlu0 %159
      %v161 = vsel %vm103, %v157, 0.0
      %162 = vadd.xlane.f32.xlu0 %v161
      %v163 = vpop.xlane.xlu0 %162
      %v164 = vrcp.pop 32.0
      %v165 = vmul.f32 %v160, %v164
      %v166 = vmul.f32 %v163, %v164
      %v167 = vsub.f32 %v156, %v165
      %v168 = vsub.f32 %v157, %v166
      %v169 = vmul.f32 %v167, %v167
      %v170 = vmul.f32 %v168, %v168
      %v171 = vsel %vm103, %v169, 0.0
      %172 = vadd.xlane.f32.xlu0 %v171
      %v173 = vpop.xlane.xlu0 %172
      %v174 = vsel %vm103, %v170, 0.0
      %175 = vadd.xlane.f32.xlu0 %v174
      %v176 = vpop.xlane.xlu0 %175
      %v177 = vmul.f32 %v173, %v164
      %v178 = vmul.f32 %v176, %v164
      %v179 = vadd.f32 %v177, 1e-12
      %v180 = vadd.f32 %v178, 1e-12
      %v181 = vrsqrt.pop %v179
      %v182 = vrsqrt.pop %v180
      %v183 = vmul.f32 %v167, %v181
      %v184 = vmul.f32 %v168, %v182
      %v185 = vld [vmem:[%s3] sm:$0x1]
      %v187 = vlaneseq
      %v188 = vshrl.u32 %v187, 7
      %v189 = vsub.s32 0, %v188
      %v190 = vrot.slane %v185, %v189
      %v192 = vmul.f32 %v183, %v190
      %v193 = vmul.f32 %v184, %v190
      %v194 = vld [vmem:[%s4] sm:$0x1]
      %v196 = vlaneseq
      %v197 = vshrl.u32 %v196, 7
      %v198 = vsub.s32 0, %v197
      %v199 = vrot.slane %v194, %v198
      %v201 = vadd.f32 %v192, %v199
      %v202 = vadd.f32 %v193, %v199
      %v203 = vpack.c.bf16 %v202, %v201
      %v205 = vunpack.c.l.b16 %v203
      %v206 = vunpack.c.h.b16 %v203
      %v207 = vpack.c.b16 %v205, %v205
      %v208 = vpack.c.b16 %v206, %v206
      %vm211 = vcmask 257024
      %212 = vst.msk [vmem:[#allocation2] sm:$0xf] %vm211, %v207
      %213 = vst.msk [vmem:[#allocation2 + $0x4] sm:$0xf] %vm211, %v208
    $region45: #{tpu_custom_call.1} parent=1 // pred_fallthru
      _
    %v214 = vld [vmem:[#allocation2] sm:$0xf]
    %v215 = vld [vmem:[#allocation2 + $0x4] sm:$0xf]
    %v216 = vld [vmem:[#allocation8] sm:$0xff]
    %v217 = vld [vmem:[#allocation8 + $0x8] sm:$0xf]
    %v218 = vld [vmem:[#allocation8 + $0xc] sm:$0xff]
    %v219 = vld [vmem:[#allocation8 + $0x14] sm:$0xf]
    %v220 = vld [vmem:[#allocation8 + $0x18] sm:$0xff]
    %v221 = vld [vmem:[#allocation8 + $0x20] sm:$0xf]
    %v222 = vld [vmem:[#allocation8 + $0x24] sm:$0xff]
    %v223 = vld [vmem:[#allocation8 + $0x2c] sm:$0xf]
    %v224 = vld [vmem:[%s6] sm:$0x7]
    %v226 = vlaneseq
    %v227 = vshrl.u32 %v226, 7
    %v228 = vsub.s32 0, %v227
    %v229 = vrot.slane %v224, %v228
    %v230 = vlaneseq
    %v231 = vshrl.u32 %v230, 7
    %v232 = vsub.s32 1, %v231
    %v233 = vrot.slane %v224, %v232
    %v234 = vlaneseq
    %v235 = vshrl.u32 %v234, 7
    %v236 = vsub.s32 2, %v235
    %v237 = vrot.slane %v224, %v236
    %v243 = vunpack.c.l.b16 %v214
    %v244 = vunpack.c.l.b16 %v215
    %v245 = vpack.c.b16 %v244, %v243
    %v254 = vunpack.c.l.b16 %v216
    %v255 = vunpack.c.h.b16 %v216
    %v256 = vunpack.c.l.b16 %v217
    %v257 = vunpack.c.l.b16 %v218
    %v258 = vunpack.c.h.b16 %v218
    %v259 = vunpack.c.l.b16 %v219
    %v260 = vunpack.c.l.b16 %v220
    %v261 = vunpack.c.h.b16 %v220
    %v262 = vunpack.c.l.b16 %v221
    %v263 = vunpack.c.l.b16 %v222
    %v264 = vunpack.c.h.b16 %v222
    %v265 = vunpack.c.l.b16 %v223
    %v266 = vpack.c.b16 %v257, %v254
    %v267 = vpack.c.b16 %v258, %v255
    %v268 = vpack.c.b16 %v259, %v256
    %v269 = vpack.c.b16 %v263, %v260
    %v270 = vpack.c.b16 %v264, %v261
    %v271 = vpack.c.b16 %v265, %v262
    %vm278 = vcmask 261120
    %v280 = vsel %vm278, %v245, 0
    %282 = vmatprep.subr.bf16.mxu0 0
    %283 = vmatpush1.bf16.msra.mxu0 0
    %284 = vmatprep.subr.bf16.mxu0 0
    %285 = vmatpush1.bf16.msra.mxu0 0
    %286 = vmatprep.subr.bf16.mxu0 0
    %287 = vmatpush1.bf16.msra.mxu0 0
    %288 = vmatprep.subr.bf16.mxu0 0
    %289 = vmatpush1.bf16.msra.mxu0 0
    %290 = vmatprep.subr.bf16.mxu0 0
    %291 = vmatpush1.bf16.msra.mxu0 0
    %292 = vmatprep.subr.bf16.mxu0 0
    %293 = vmatpush1.bf16.msra.mxu0 0
    %294 = vmatprep.subr.bf16.mxu0 %v270
    %295 = vmatpush1.bf16.msra.mxu0 %v269
    %296 = vmatprep.subr.bf16.mxu0 %v267
    %297 = vmatpush1.bf16.msra.mxu0 %v266
    %298 = vmatprep.subr.bf16.mxu0 0
    %299 = vmatpush2.bf16.msra.mxu0 0
    %300 = vmatprep.subr.bf16.mxu0 0
    %301 = vmatpush2.bf16.msra.mxu0 0
    %302 = vmatprep.subr.bf16.mxu0 0
    %303 = vmatpush2.bf16.msra.mxu0 0
    %304 = vmatprep.subr.bf16.mxu0 0
    %305 = vmatpush2.bf16.msra.mxu0 0
    %306 = vmatprep.subr.bf16.mxu0 0
    %307 = vmatpush2.bf16.msra.mxu0 0
    %308 = vmatprep.subr.bf16.mxu0 0
    %309 = vmatpush2.bf16.msra.mxu0 0
    %310 = vmatprep.subr.bf16.mxu0 0
    %311 = vmatpush2.bf16.msra.mxu0 0
    %312 = vmatprep.subr.bf16.mxu0 0
    %313 = vmatpush2.bf16.msra.mxu0 0
    %314 = vmatprep.mubr.bf16.mxu0 0
    %315 = vmatmul.mubr.bf16.gmra.mxu0 %v280
    %v316 = vpop.f32.mrf.mxu0
    %v317 = vadd.f32 %v229, %v316
    %v318 = vpop.f32.mrf.mxu0
    %v319 = vadd.f32 %v233, %v318
    %v320 = vpop.f32.mrf.mxu0
    %v321 = vadd.f32 %v229, %v320
    %v322 = vpop.f32.mrf.mxu0
    %v323 = vadd.f32 %v233, %v322
    %324 = vdwg.mxu0
    %325 = vmatprep.subr.bf16.mxu0 0
    %326 = vmatpush1.bf16.msra.mxu0 0
    %327 = vmatprep.subr.bf16.mxu0 0
    %328 = vmatpush1.bf16.msra.mxu0 0
    %329 = vmatprep.subr.bf16.mxu0 0
    %330 = vmatpush1.bf16.msra.mxu0 0
    %331 = vmatprep.subr.bf16.mxu0 0
    %332 = vmatpush1.bf16.msra.mxu0 0
    %333 = vmatprep.subr.bf16.mxu0 0
    %334 = vmatpush1.bf16.msra.mxu0 0
    %335 = vmatprep.subr.bf16.mxu0 0
    %336 = vmatpush1.bf16.msra.mxu0 0
    %337 = vmatprep.subr.bf16.mxu0 0
    %338 = vmatpush1.bf16.msra.mxu0 %v271
    %339 = vmatprep.subr.bf16.mxu0 0
    %340 = vmatpush1.bf16.msra.mxu0 %v268
    %341 = vmatprep.subr.bf16.mxu0 0
    %342 = vmatpush2.bf16.msra.mxu0 0
    %343 = vmatprep.subr.bf16.mxu0 0
    %344 = vmatpush2.bf16.msra.mxu0 0
    %345 = vmatprep.subr.bf16.mxu0 0
    %346 = vmatpush2.bf16.msra.mxu0 0
    %347 = vmatprep.subr.bf16.mxu0 0
    %348 = vmatpush2.bf16.msra.mxu0 0
    %349 = vmatprep.subr.bf16.mxu0 0
    %350 = vmatpush2.bf16.msra.mxu0 0
    %351 = vmatprep.subr.bf16.mxu0 0
    %352 = vmatpush2.bf16.msra.mxu0 0
    %353 = vmatprep.subr.bf16.mxu0 0
    %354 = vmatpush2.bf16.msra.mxu0 0
    %355 = vmatprep.subr.bf16.mxu0 0
    %356 = vmatpush2.bf16.msra.mxu0 0
    %357 = vmatprep.mubr.bf16.mxu0 0
    %358 = vmatmul.mubr.bf16.gmra.mxu0 %v280
    %v359 = vpop.f32.mrf.mxu0
    %v360 = vadd.f32 %v237, %v359
    %v361 = vpop.f32.mrf.mxu0
    %v362 = vpop.f32.mrf.mxu0
    %v363 = vadd.f32 %v237, %v362
    %v364 = vpop.f32.mrf.mxu0
    %365 = vdwg.mxu0
    %v366 = vpack.c.bf16 %v321, %v317
    %v367 = vpack.c.bf16 %v323, %v319
    %v368 = vpack.c.bf16 %v363, %v360
    %v372 = vunpack.c.l.b16 %v366
    %v373 = vunpack.c.l.b16 %v367
    %v374 = vunpack.c.l.b16 %v368
    %v375 = vunpack.c.h.b16 %v366
    %v376 = vunpack.c.h.b16 %v367
    %v377 = vunpack.c.h.b16 %v368
    %v378 = vpack.c.b16 %v373, %v372
    %v379 = vpack.c.b16 %v374, %v374
    %v380 = vpack.c.b16 %v376, %v375
    %v381 = vpack.c.b16 %v377, %v377
    %386 = vst [vmem:[#allocation9] sm:$0xff] %v378
    %387 = vst [vmem:[#allocation9 + $0x8] sm:$0xf] %v379
    %388 = vst [vmem:[#allocation9 + $0xc] sm:$0xff] %v380
    %389 = vst [vmem:[#allocation9 + $0x14] sm:$0xf] %v381
    // Predicated region
    $region46: #{tpu_custom_call.1} parent=1 // pred_check
      _
    $region47: #{tpu_custom_call.1} parent=1 // pred_check_branch
      %391 = sbr.rel (0) target = $region49
    $region48: #{tpu_custom_call.1} parent=1 // pred_region
      %s393 = ssub.s32 384, 384
      %394 = vsyncadd [#allocation5], %s393
      %s395 = sshll.u32 [#allocation9], 4
      %s396 = int_to_ptr.vmem [resolvable:$true] %s395
      %401 = dma.vmem_to_hbm [thread:$0]  %s396, 384, %s7, [#allocation5], 192, 192, 12
    $region49: #{tpu_custom_call.1} parent=1 // pred_fallthru
      _
    // Predicated region
    $region50: #{tpu_custom_call.1} parent=1 // pred_check
      _
    $region51: #{tpu_custom_call.1} parent=1 // pred_check_branch
      %403 = sbr.rel (0) target = $region53
    $region52: #{tpu_custom_call.1} parent=1 // pred_region
      %404 = dma.done [#allocation5], 384
    $region53: #{tpu_custom_call.1} parent=1 // pred_fallthru
      _
    %405 = vsyncpa [#allocation4], 1
    %406 = vsyncpa [#allocation7], 1
    %407 = vsyncpa [#allocation5], 1

// kernel: tpu_custom_call.1
$region0: #{tpu_custom_call.1}
  #allocation0 [shape = 'u32[]', space=smem, size = 0x4, offset = 0x4, fixed_abs, tag = 'smem constant byte address 0x4 - core index']
  #allocation1 [shape = 'u32[144,128]{1,0:T(1,128)}', space=vmem, size = 0x12000, scoped, tag = 'internal scratch']
  #allocation2 [shape = 'bf16[16,32]{1,0:T(8,128)(2,1)}', space=vmem, size = 0x1000, scoped, tag = 'scratch operand']
  %s0 = inlined_call_operand.hbm [shape: bf16[16,32], index: 0, kind: input, shape index: {}]
  %s1 = inlined_call_operand.hbm [shape: bf16[32,32], index: 1, kind: input, shape index: {}]
  %s2 = inlined_call_operand.vmem [shape: f32[1,32], index: 2, kind: input, shape index: {}]
  %s3 = inlined_call_operand.vmem [shape: f32[1,32], index: 3, kind: input, shape index: {}]
  %s4 = inlined_call_operand.vmem [shape: f32[1,32], index: 4, kind: input, shape index: {}]
  %s5 = inlined_call_operand.hbm [shape: bf16[32,384], index: 5, kind: input, shape index: {}]
  %s6 = inlined_call_operand.vmem [shape: f32[1,384], index: 6, kind: input, shape index: {}]
  %s7 = inlined_call_operand.hbm [shape: bf16[16,384], index: 7, kind: output, shape index: {}]
  %s8 = sld [smem:[#allocation0]]
  $region54: #{tpu_custom_call.1} parent=0
    _
  %s10 = ssub.s32 1, %s8
  %s11 = scalar_select 0, %s10, %s8
  $region1: #{tpu_custom_call.1} parent=0
    #allocation3 [shape = 'u8[4096]{0}', space=vmem, size = 0x1000, scoped, tag = 'input window, operand 0, single buffered']
    #allocation4 [shape = 's32[1]{0}', space=sflag, size = 0x4, scoped, tag = 'scoped memory for tpu_custom_call.1']
    #allocation5 [shape = 's32[1]{0}', space=sflag, size = 0x4, scoped, tag = 'scoped memory for tpu_custom_call.1']
    #allocation6 [shape = 'u8[8192]{0}', space=vmem, size = 0x2000, scoped, tag = 'input window, operand 1, single buffered']
    #allocation7 [shape = 's32[1]{0}', space=sflag, size = 0x4, scoped, tag = 'scoped memory for tpu_custom_call.1']
    #allocation8 [shape = 'u8[24576]{0}', space=vmem, size = 0x6000, scoped, tag = 'input window, operand 5, single buffered']
    #allocation9 [shape = 'u8[12288]{0}', space=vmem, size = 0x3000, scoped, tag = 'output window, operand 0, single buffered']
    %12 = vsyncpa [#allocation4], 0
    %13 = vsyncpa [#allocation7], 0
    %14 = vsyncpa [#allocation5], 0
    // Predicated region
    $region2: #{tpu_custom_call.1} parent=1 // pred_check
      _
    $region3: #{tpu_custom_call.1} parent=1 // pred_check_branch
      %16 = sbr.rel (0) target = $region5
    $region4: #{tpu_custom_call.1} parent=1 // pred_region
      %s18 = ssub.s32 128, 128
      %19 = vsyncadd [#allocation4], %s18
      %s20 = sshll.u32 [#allocation3], 4
      %s21 = int_to_ptr.vmem [resolvable:$true] %s20
      %26 = dma.hbm_to_vmem [thread:$0]  %s0, 128, %s21, [#allocation4], 64, 64, 4
    $region5: #{tpu_custom_call.1} parent=1 // pred_fallthru
      _
    // Predicated region
    $region6: #{tpu_custom_call.1} parent=1 // pred_check
      _
    $region7: #{tpu_custom_call.1} parent=1 // pred_check_branch
      %28 = sbr.rel (0) target = $region9
    $region8: #{tpu_custom_call.1} parent=1 // pred_region
      %s30 = ssub.s32 256, 256
      %31 = vsyncadd [#allocation7], %s30
      %s32 = sshll.u32 [#allocation6], 4
      %s33 = int_to_ptr.vmem [resolvable:$true] %s32
      %38 = dma.hbm_to_vmem [thread:$0]  %s1, 256, %s33, [#allocation7], 64, 64, 4
    $region9: #{tpu_custom_call.1} parent=1 // pred_fallthru
      _
    // Predicated region
    $region10: #{tpu_custom_call.1} parent=1 // pred_check
      _
    $region11: #{tpu_custom_call.1} parent=1 // pred_check_branch
      %40 = sbr.rel (0) target = $region13
    $region12: #{tpu_custom_call.1} parent=1 // pred_region
      _
    $region13: #{tpu_custom_call.1} parent=1 // pred_fallthru
      _
    // Predicated region
    $region14: #{tpu_custom_call.1} parent=1 // pred_check
      _
    $region15: #{tpu_custom_call.1} parent=1 // pred_check_branch
      %42 = sbr.rel (0) target = $region17
    $region16: #{tpu_custom_call.1} parent=1 // pred_region
      _
    $region17: #{tpu_custom_call.1} parent=1 // pred_fallthru
      _
    // Predicated region
    $region18: #{tpu_custom_call.1} parent=1 // pred_check
      _
    $region19: #{tpu_custom_call.1} parent=1 // pred_check_branch
      %44 = sbr.rel (0) target = $region21
    $region20: #{tpu_custom_call.1} parent=1 // pred_region
      _
    $region21: #{tpu_custom_call.1} parent=1 // pred_fallthru
      _
    // Predicated region
    $region22: #{tpu_custom_call.1} parent=1 // pred_check
      _
    $region23: #{tpu_custom_call.1} parent=1 // pred_check_branch
      %46 = sbr.rel (0) target = $region25
    $region24: #{tpu_custom_call.1} parent=1 // pred_region
      %s48 = ssub.s32 768, 768
      %49 = vsyncadd [#allocation7], %s48
      %s50 = sshll.u32 [#allocation8], 4
      %s51 = int_to_ptr.vmem [resolvable:$true] %s50
      %56 = dma.hbm_to_vmem [thread:$0]  %s5, 768, %s51, [#allocation7], 192, 192, 12
    $region25: #{tpu_custom_call.1} parent=1 // pred_fallthru
      _
    // Predicated region
    $region26: #{tpu_custom_call.1} parent=1 // pred_check
      _
    $region27: #{tpu_custom_call.1} parent=1 // pred_check_branch
      %58 = sbr.rel (0) target = $region29
    $region28: #{tpu_custom_call.1} parent=1 // pred_region
      _
    $region29: #{tpu_custom_call.1} parent=1 // pred_fallthru
      _
    // Predicated region
    $region30: #{tpu_custom_call.1} parent=1 // pred_check
      _
    $region31: #{tpu_custom_call.1} parent=1 // pred_check_branch
      %60 = sbr.rel (0) target = $region33
    $region32: #{tpu_custom_call.1} parent=1 // pred_region
      %61 = dma.done [#allocation4], 128
    $region33: #{tpu_custom_call.1} parent=1 // pred_fallthru
      _
    // Predicated region
    $region34: #{tpu_custom_call.1} parent=1 // pred_check
      _
    $region35: #{tpu_custom_call.1} parent=1 // pred_check_branch
      %63 = sbr.rel (0) target = $region37
    $region36: #{tpu_custom_call.1} parent=1 // pred_region
      %64 = dma.done [#allocation7], 256
    $region37: #{tpu_custom_call.1} parent=1 // pred_fallthru
      _
    // Predicated region
    $region38: #{tpu_custom_call.1} parent=1 // pred_check
      _
    $region39: #{tpu_custom_call.1} parent=1 // pred_check_branch
      %66 = sbr.rel (0) target = $region41
    $region40: #{tpu_custom_call.1} parent=1 // pred_region
      %67 = dma.done [#allocation7], 768
    $region41: #{tpu_custom_call.1} parent=1 // pred_fallthru
      _
    %p69 = scmp.eq.s32.totalorder 0, 0
    // Predicated region
    $region42: #{tpu_custom_call.1} parent=1 // pred_check
      %p70 = pneg %p69
    $region43: #{tpu_custom_call.1} parent=1 // pred_check_branch
      %72 = sbr.rel (%p70) target = $region45
    $region44: #{tpu_custom_call.1} parent=1 // pred_region
      %v73 = vld [vmem:[#allocation3] sm:$0xf]
      %v74 = vld [vmem:[#allocation3 + $0x4] sm:$0xf]
      %v75 = vld [vmem:[#allocation6] sm:$0xf]
      %v76 = vld [vmem:[#allocation6 + $0x4] sm:$0xf]
      %v77 = vld [vmem:[#allocation6 + $0x8] sm:$0xf]
      %v78 = vld [vmem:[#allocation6 + $0xc] sm:$0xf]
      %v79 = vld [vmem:[%s2] sm:$0x1]
      %v81 = vlaneseq
      %v82 = vshrl.u32 %v81, 7
      %v83 = vsub.s32 0, %v82
      %v84 = vrot.slane %v79, %v83
      %v88 = vunpack.c.l.b16 %v73
      %v89 = vunpack.c.l.b16 %v74
      %v90 = vpack.c.b16 %v89, %v88
      %v95 = vunpack.c.l.b16 %v75
      %v96 = vunpack.c.l.b16 %v76
      %v97 = vunpack.c.l.b16 %v77
      %v98 = vunpack.c.l.b16 %v78
      %v99 = vpack.c.b16 %v96, %v95
      %v100 = vpack.c.b16 %v98, %v97
      %vm103 = vcmask 261120
      %v105 = vsel %vm103, %v90, 0
      %107 = vmatprep.subr.bf16.mxu0 0
      %108 = vmatpush1.bf16.msra.mxu0 0
      %109 = vmatprep.subr.bf16.mxu0 0
      %110 = vmatpush1.bf16.msra.mxu0 0
      %111 = vmatprep.subr.bf16.mxu0 0
      %112 = vmatpush1.bf16.msra.mxu0 0
      %113 = vmatprep.subr.bf16.mxu0 0
      %114 = vmatpush1.bf16.msra.mxu0 0
      %115 = vmatprep.subr.bf16.mxu0 0
      %116 = vmatpush1.bf16.msra.mxu0 0
      %117 = vmatprep.subr.bf16.mxu0 0
      %118 = vmatpush1.bf16.msra.mxu0 0
      %119 = vmatprep.subr.bf16.mxu0 0
      %120 = vmatpush1.bf16.msra.mxu0 %v100
      %121 = vmatprep.subr.bf16.mxu0 0
      %122 = vmatpush1.bf16.msra.mxu0 %v99
      %123 = vmatprep.subr.bf16.mxu0 0
      %124 = vmatpush2.bf16.msra.mxu0 0
      %125 = vmatprep.subr.bf16.mxu0 0
      %126 = vmatpush2.bf16.msra.mxu0 0
      %127 = vmatprep.subr.bf16.mxu0 0
      %128 = vmatpush2.bf16.msra.mxu0 0
      %129 = vmatprep.subr.bf16.mxu0 0
      %130 = vmatpush2.bf16.msra.mxu0 0
      %131 = vmatprep.subr.bf16.mxu0 0
      %132 = vmatpush2.bf16.msra.mxu0 0
      %133 = vmatprep.subr.bf16.mxu0 0
      %134 = vmatpush2.bf16.msra.mxu0 0
      %135 = vmatprep.subr.bf16.mxu0 0
      %136 = vmatpush2.bf16.msra.mxu0 0
      %137 = vmatprep.subr.bf16.mxu0 0
      %138 = vmatpush2.bf16.msra.mxu0 0
      %139 = vmatprep.mubr.bf16.mxu0 0
      %140 = vmatmul.mubr.bf16.gmra.mxu0 %v105
      %v141 = vpop.f32.mrf.mxu0
      %v142 = vadd.f32 %v84, %v141
      %v143 = vpop.f32.mrf.mxu0
      %v144 = vpop.f32.mrf.mxu0
      %v145 = vadd.f32 %v84, %v144
      %v146 = vpop.f32.mrf.mxu0
      %147 = vdwg.mxu0
      %v148 = vmul.f32 %v142, 0.5
      %v149 = vmul.f32 %v145, 0.5
      %v150 = vmul.f32 %v142, 0.70710677
      %v151 = vmul.f32 %v145, 0.70710677
      %v152 = verf.f32.pop %v150
      %v153 = verf.f32.pop %v151
      %v154 = vadd.f32 %v152, 1.0
      %v155 = vadd.f32 %v153, 1.0
      %v156 = vmul.f32 %v148, %v154
      %v157 = vmul.f32 %v149, %v155
      %v158 = vsel %vm103, %v156, 0.0
      %159 = vadd.xlane.f32.xlu0 %v158
      %v160 = vpop.xlane.xlu0 %159
      %v161 = vsel %vm103, %v157, 0.0
      %162 = vadd.xlane.f32.xlu0 %v161
      %v163 = vpop.xlane.xlu0 %162
      %v164 = vrcp.pop 32.0
      %v165 = vmul.f32 %v160, %v164
      %v166 = vmul.f32 %v163, %v164
      %v167 = vsub.f32 %v156, %v165
      %v168 = vsub.f32 %v157, %v166
      %v169 = vmul.f32 %v167, %v167
      %v170 = vmul.f32 %v168, %v168
      %v171 = vsel %vm103, %v169, 0.0
      %172 = vadd.xlane.f32.xlu0 %v171
      %v173 = vpop.xlane.xlu0 %172
      %v174 = vsel %vm103, %v170, 0.0
      %175 = vadd.xlane.f32.xlu0 %v174
      %v176 = vpop.xlane.xlu0 %175
      %v177 = vmul.f32 %v173, %v164
      %v178 = vmul.f32 %v176, %v164
      %v179 = vadd.f32 %v177, 1e-12
      %v180 = vadd.f32 %v178, 1e-12
      %v181 = vrsqrt.pop %v179
      %v182 = vrsqrt.pop %v180
      %v183 = vmul.f32 %v167, %v181
      %v184 = vmul.f32 %v168, %v182
      %v185 = vld [vmem:[%s3] sm:$0x1]
      %v187 = vlaneseq
      %v188 = vshrl.u32 %v187, 7
      %v189 = vsub.s32 0, %v188
      %v190 = vrot.slane %v185, %v189
      %v192 = vmul.f32 %v183, %v190
      %v193 = vmul.f32 %v184, %v190
      %v194 = vld [vmem:[%s4] sm:$0x1]
      %v196 = vlaneseq
      %v197 = vshrl.u32 %v196, 7
      %v198 = vsub.s32 0, %v197
      %v199 = vrot.slane %v194, %v198
      %v201 = vadd.f32 %v192, %v199
      %v202 = vadd.f32 %v193, %v199
      %v203 = vpack.c.bf16 %v202, %v201
      %v205 = vunpack.c.l.b16 %v203
      %v206 = vunpack.c.h.b16 %v203
      %v207 = vpack.c.b16 %v205, %v205
      %v208 = vpack.c.b16 %v206, %v206
      %vm211 = vcmask 257024
      %212 = vst.msk [vmem:[#allocation2] sm:$0xf] %vm211, %v207
      %213 = vst.msk [vmem:[#allocation2 + $0x4] sm:$0xf] %vm211, %v208
    $region45: #{tpu_custom_call.1} parent=1 // pred_fallthru
      _
    %v214 = vld [vmem:[#allocation2] sm:$0xf]
    %v215 = vld [vmem:[#allocation2 + $0x4] sm:$0xf]
    %v216 = vld [vmem:[#allocation8] sm:$0xff]
    %v217 = vld [vmem:[#allocation8 + $0x8] sm:$0xf]
    %v218 = vld [vmem:[#allocation8 + $0xc] sm:$0xff]
    %v219 = vld [vmem:[#allocation8 + $0x14] sm:$0xf]
    %v220 = vld [vmem:[#allocation8 + $0x18] sm:$0xff]
    %v221 = vld [vmem:[#allocation8 + $0x20] sm:$0xf]
    %v222 = vld [vmem:[#allocation8 + $0x24] sm:$0xff]
    %v223 = vld [vmem:[#allocation8 + $0x2c] sm:$0xf]
    %v224 = vld [vmem:[%s6] sm:$0x7]
    %v226 = vlaneseq
    %v227 = vshrl.u32 %v226, 7
    %v228 = vsub.s32 0, %v227
    %v229 = vrot.slane %v224, %v228
    %v230 = vlaneseq
    %v231 = vshrl.u32 %v230, 7
    %v232 = vsub.s32 1, %v231
    %v233 = vrot.slane %v224, %v232
    %v234 = vlaneseq
    %v235 = vshrl.u32 %v234, 7
    %v236 = vsub.s32 2, %v235
    %v237 = vrot.slane %v224, %v236
    %v243 = vunpack.c.l.b16 %v214
    %v244 = vunpack.c.l.b16 %v215
    %v245 = vpack.c.b16 %v244, %v243
    %v254 = vunpack.c.l.b16 %v216
    %v255 = vunpack.c.h.b16 %v216
    %v256 = vunpack.c.l.b16 %v217
    %v257 = vunpack.c.l.b16 %v218
    %v258 = vunpack.c.h.b16 %v218
    %v259 = vunpack.c.l.b16 %v219
    %v260 = vunpack.c.l.b16 %v220
    %v261 = vunpack.c.h.b16 %v220
    %v262 = vunpack.c.l.b16 %v221
    %v263 = vunpack.c.l.b16 %v222
    %v264 = vunpack.c.h.b16 %v222
    %v265 = vunpack.c.l.b16 %v223
    %v266 = vpack.c.b16 %v257, %v254
    %v267 = vpack.c.b16 %v258, %v255
    %v268 = vpack.c.b16 %v259, %v256
    %v269 = vpack.c.b16 %v263, %v260
    %v270 = vpack.c.b16 %v264, %v261
    %v271 = vpack.c.b16 %v265, %v262
    %vm278 = vcmask 261120
    %v280 = vsel %vm278, %v245, 0
    %282 = vmatprep.subr.bf16.mxu0 0
    %283 = vmatpush1.bf16.msra.mxu0 0
    %284 = vmatprep.subr.bf16.mxu0 0
    %285 = vmatpush1.bf16.msra.mxu0 0
    %286 = vmatprep.subr.bf16.mxu0 0
    %287 = vmatpush1.bf16.msra.mxu0 0
    %288 = vmatprep.subr.bf16.mxu0 0
    %289 = vmatpush1.bf16.msra.mxu0 0
    %290 = vmatprep.subr.bf16.mxu0 0
    %291 = vmatpush1.bf16.msra.mxu0 0
    %292 = vmatprep.subr.bf16.mxu0 0
    %293 = vmatpush1.bf16.msra.mxu0 0
    %294 = vmatprep.subr.bf16.mxu0 %v270
    %295 = vmatpush1.bf16.msra.mxu0 %v269
    %296 = vmatprep.subr.bf16.mxu0 %v267
    %297 = vmatpush1.bf16.msra.mxu0 %v266
    %298 = vmatprep.subr.bf16.mxu0 0
    %299 = vmatpush2.bf16.msra.mxu0 0
    %300 = vmatprep.subr.bf16.mxu0 0
    %301 = vmatpush2.bf16.msra.mxu0 0
    %302 = vmatprep.subr.bf16.mxu0 0
    %303 = vmatpush2.bf16.msra.mxu0 0
    %304 = vmatprep.subr.bf16.mxu0 0
    %305 = vmatpush2.bf16.msra.mxu0 0
    %306 = vmatprep.subr.bf16.mxu0 0
    %307 = vmatpush2.bf16.msra.mxu0 0
    %308 = vmatprep.subr.bf16.mxu0 0
    %309 = vmatpush2.bf16.msra.mxu0 0
    %310 = vmatprep.subr.bf16.mxu0 0
    %311 = vmatpush2.bf16.msra.mxu0 0
    %312 = vmatprep.subr.bf16.mxu0 0
    %313 = vmatpush2.bf16.msra.mxu0 0
    %314 = vmatprep.mubr.bf16.mxu0 0
    %315 = vmatmul.mubr.bf16.gmra.mxu0 %v280
    %v316 = vpop.f32.mrf.mxu0
    %v317 = vadd.f32 %v229, %v316
    %v318 = vpop.f32.mrf.mxu0
    %v319 = vadd.f32 %v233, %v318
    %v320 = vpop.f32.mrf.mxu0
    %v321 = vadd.f32 %v229, %v320
    %v322 = vpop.f32.mrf.mxu0
    %v323 = vadd.f32 %v233, %v322
    %324 = vdwg.mxu0
    %325 = vmatprep.subr.bf16.mxu0 0
    %326 = vmatpush1.bf16.msra.mxu0 0
    %327 = vmatprep.subr.bf16.mxu0 0
    %328 = vmatpush1.bf16.msra.mxu0 0
    %329 = vmatprep.subr.bf16.mxu0 0
    %330 = vmatpush1.bf16.msra.mxu0 0
    %331 = vmatprep.subr.bf16.mxu0 0
    %332 = vmatpush1.bf16.msra.mxu0 0
    %333 = vmatprep.subr.bf16.mxu0 0
    %334 = vmatpush1.bf16.msra.mxu0 0
    %335 = vmatprep.subr.bf16.mxu0 0
    %336 = vmatpush1.bf16.msra.mxu0 0
    %337 = vmatprep.subr.bf16.mxu0 0
    %338 = vmatpush1.bf16.msra.mxu0 %v271
    %339 = vmatprep.subr.bf16.mxu0 0
    %340 = vmatpush1.bf16.msra.mxu0 %v268
    %341 = vmatprep.subr.bf16.mxu0 0
    %342 = vmatpush2.bf16.msra.mxu0 0
    %343 = vmatprep.subr.bf16.mxu0 0
    %344 = vmatpush2.bf16.msra.mxu0 0
    %345 = vmatprep.subr.bf16.mxu0 0
    %346 = vmatpush2.bf16.msra.mxu0 0
    %347 = vmatprep.subr.bf16.mxu0 0
    %348 = vmatpush2.bf16.msra.mxu0 0
    %349 = vmatprep.subr.bf16.mxu0 0
    %350 = vmatpush2.bf16.msra.mxu0 0
    %351 = vmatprep.subr.bf16.mxu0 0
    %352 = vmatpush2.bf16.msra.mxu0 0
    %353 = vmatprep.subr.bf16.mxu0 0
    %354 = vmatpush2.bf16.msra.mxu0 0
    %355 = vmatprep.subr.bf16.mxu0 0
    %356 = vmatpush2.bf16.msra.mxu0 0
    %357 = vmatprep.mubr.bf16.mxu0 0
    %358 = vmatmul.mubr.bf16.gmra.mxu0 %v280
    %v359 = vpop.f32.mrf.mxu0
    %v360 = vadd.f32 %v237, %v359
    %v361 = vpop.f32.mrf.mxu0
    %v362 = vpop.f32.mrf.mxu0
    %v363 = vadd.f32 %v237, %v362
    %v364 = vpop.f32.mrf.mxu0
    %365 = vdwg.mxu0
    %v366 = vpack.c.bf16 %v321, %v317
    %v367 = vpack.c.bf16 %v323, %v319
    %v368 = vpack.c.bf16 %v363, %v360
    %v372 = vunpack.c.l.b16 %v366
    %v373 = vunpack.c.l.b16 %v367
    %v374 = vunpack.c.l.b16 %v368
    %v375 = vunpack.c.h.b16 %v366
    %v376 = vunpack.c.h.b16 %v367
    %v377 = vunpack.c.h.b16 %v368
    %v378 = vpack.c.b16 %v373, %v372
    %v379 = vpack.c.b16 %v374, %v374
    %v380 = vpack.c.b16 %v376, %v375
    %v381 = vpack.c.b16 %v377, %v377
    %386 = vst [vmem:[#allocation9] sm:$0xff] %v378
    %387 = vst [vmem:[#allocation9 + $0x8] sm:$0xf] %v379
    %388 = vst [vmem:[#allocation9 + $0xc] sm:$0xff] %v380
    %389 = vst [vmem:[#allocation9 + $0x14] sm:$0xf] %v381
    // Predicated region
    $region46: #{tpu_custom_call.1} parent=1 // pred_check
      _
    $region47: #{tpu_custom_call.1} parent=1 // pred_check_branch
      %391 = sbr.rel (0) target = $region49
    $region48: #{tpu_custom_call.1} parent=1 // pred_region
      %s393 = ssub.s32 384, 384
      %394 = vsyncadd [#allocation5], %s393
      %s395 = sshll.u32 [#allocation9], 4
      %s396 = int_to_ptr.vmem [resolvable:$true] %s395
      %401 = dma.vmem_to_hbm [thread:$0]  %s396, 384, %s7, [#allocation5], 192, 192, 12
    $region49: #{tpu_custom_call.1} parent=1 // pred_fallthru
      _
    // Predicated region
    $region50: #{tpu_custom_call.1} parent=1 // pred_check
      _
    $region51: #{tpu_custom_call.1} parent=1 // pred_check_branch
      %403 = sbr.rel (0) target = $region53
    $region52: #{tpu_custom_call.1} parent=1 // pred_region
      %404 = dma.done [#allocation5], 384
    $region53: #{tpu_custom_call.1} parent=1 // pred_fallthru
      _
    %405 = vsyncpa [#allocation4], 1
    %406 = vsyncpa [#allocation7], 1
    %407 = vsyncpa [#allocation5], 1

</llo_original>
